<compile_context>
chip_gen: v7x
topology: tpu7x:2x2x1
jax: 0.10.0
libtpu: 0.0.40
codegen_flags: <defaults>
</compile_context>

<pallas_src>
import jax
import jax.numpy as jnp
from jax.experimental import pallas as pl
from jax.experimental.pallas import tpu as pltpu


def _make_mlp_kernel(num_layers):
    """Fused MLP kernel: num_layers Linear (no bias), ReLU between layers only."""

    def kernel(*refs):
        x_ref = refs[0]
        w_refs = refs[1:1 + num_layers]
        o_ref = refs[1 + num_layers]

        h = x_ref[...]
        for li in range(num_layers):
            # MXU matmul with f32 accumulation regardless of input dtype.
            h = jnp.dot(h, w_refs[li][...], preferred_element_type=jnp.float32)
            if li < num_layers - 1:
                h = jnp.maximum(h, 0.0)       # ReLU between hidden layers
        o_ref[...] = h.astype(o_ref.dtype)    # no activation after last layer

    return kernel


def _pick_tile_n(n, f_max, itemsize):
    """Pick a batch tile: big (amortize grid-step overhead), >=2 grid steps when
    possible (v7x dual-TC), multiple of 8, and VMEM-safe with headroom."""
    if n <= 8:
        return n
    # Target large tiles but keep at least 2 grid steps.
    tile = min(1024, max(8, n // 2))
    # Cap so double-buffered in/out activation tiles stay well under the 32 MiB
    # default scoped VMEM limit (conservative 24 MiB budget, weights excluded
    # since they are tiny and single-resident).
    budget = 24 * 1024 * 1024
    per_row = 2 * 2 * f_max * itemsize        # (in + out) tiles, double-buffered
    tile = min(tile, max(8, budget // per_row))
    if tile >= n:
        return n
    return max(8, (tile // 8) * 8)


@jax.jit
def mlp_decoder_forward(x, weights):
    """weights: tuple of (f_in, f_out) matrices (PyTorch Linear weight, transposed).

    Computes x -> [Linear -> ReLU] * (L-1) -> Linear, matching MLPDecoder
    (bias=False, no final activation). Leading dims of x are flattened.
    """
    num_layers = len(weights)
    f_in = weights[0].shape[0]
    f_out = weights[-1].shape[1]

    orig_shape = x.shape
    x2 = x.reshape(-1, f_in)
    n = x2.shape[0]

    f_max = max(f_in, *(w.shape[1] for w in weights))
    tile_n = _pick_tile_n(n, f_max, x2.dtype.itemsize)
    grid = (pl.cdiv(n, tile_n),)

    in_specs = [pl.BlockSpec((tile_n, f_in), lambda i: (i, 0))]
    for w in weights:
        # Full weight block, constant block index -> resident across the grid.
        in_specs.append(pl.BlockSpec(w.shape, lambda i: (0, 0)))

    out = pl.pallas_call(
        _make_mlp_kernel(num_layers),
        out_shape=jax.ShapeDtypeStruct((n, f_out), x2.dtype),
        grid_spec=pl.GridSpec(
            grid=grid,
            in_specs=in_specs,
            out_specs=pl.BlockSpec((tile_n, f_out), lambda i: (i, 0)),
        ),
        compiler_params=pltpu.CompilerParams(
            dimension_semantics=("parallel",)),
    )(x2, *weights)

    return out.reshape(orig_shape[:-1] + (f_out,))


def reference_forward(x, weights):
    h = x
    for i, w in enumerate(weights):
        h = h @ w
        if i < len(weights) - 1:
            h = jnp.maximum(h, 0.0)
    return h


if __name__ == "__main__":
    # Small shapes consistent with the module: layer_sizes = [32, 64, 64, 128],
    # batch N=256 (gives a 2-step grid at tile_n=128; lane-dense 128-wide output).
    layer_sizes = [32, 64, 64, 128]
    N = 256

    key = jax.random.PRNGKey(0)
    keys = jax.random.split(key, len(layer_sizes))
    k_x, k_ws = keys[0], keys[1:]

    weights = []
    for k, fi, fo in zip(k_ws, layer_sizes[:-1], layer_sizes[1:]):
        bound = 1.0 / (fi ** 0.5)  # torch.nn.Linear default init range
        weights.append(jax.random.uniform(k, (fi, fo), jnp.float32, -bound, bound))
    weights = tuple(weights)

    x = jax.random.normal(k_x, (N, layer_sizes[0]), jnp.float32)

    # f32 path: must match the JAX reference tightly.
    out = jax.block_until_ready(mlp_decoder_forward(x, weights))
    ref = reference_forward(x, weights)
    assert out.shape == (N, layer_sizes[-1])
    assert jnp.allclose(out, ref, atol=1e-4, rtol=1e-4), "mismatch vs JAX reference"

    # bf16 activation/weight path (mem-bound optimization): f32 accumulation in
    # the kernel, loose tolerance for the input-quantization error.
    x_bf = x.astype(jnp.bfloat16)
    w_bf = tuple(w.astype(jnp.bfloat16) for w in weights)
    out_bf = jax.block_until_ready(mlp_decoder_forward(x_bf, w_bf))
    assert out_bf.shape == out.shape
    assert jnp.allclose(out_bf.astype(jnp.float32), ref, atol=1e-1, rtol=1e-1)

    print("KERNEL_OK")
</pallas_src>

<mosaic_0001>
module attributes {stable_mosaic.version = 11 : i64} {
  func.func @kernel(%arg0: i32, %arg1: memref<128x32xf32, #tpu.memory_space<vmem>>, %arg2: memref<32x64xf32, #tpu.memory_space<vmem>>, %arg3: memref<64x64xf32, #tpu.memory_space<vmem>>, %arg4: memref<64x128xf32, #tpu.memory_space<vmem>>, %arg5: memref<128x128xf32, #tpu.memory_space<vmem>>) attributes {dimension_semantics = [#tpu.dimension_semantics<parallel>], iteration_bounds = array<i64: 2>, scalar_prefetch = 0 : i64, scratch_operands = 0 : i64, tpu.core_type = #tpu.core_type<tc>, window_params = [{transform_indices = @transform_0, window_bounds = array<i64: 128, 32>}, {pipeline_mode = #tpu.pipeline_mode<synchronous>, transform_indices = @transform_1, window_bounds = array<i64: 32, 64>}, {pipeline_mode = #tpu.pipeline_mode<synchronous>, transform_indices = @transform_2, window_bounds = array<i64: 64, 64>}, {pipeline_mode = #tpu.pipeline_mode<synchronous>, transform_indices = @transform_3, window_bounds = array<i64: 64, 128>}, {transform_indices = @transform_4, window_bounds = array<i64: 128, 128>}]} {
    %c0 = arith.constant 0 : index
    %c0_0 = arith.constant 0 : index
    %0 = vector.load %arg1[%c0, %c0_0] : memref<128x32xf32, #tpu.memory_space<vmem>>, vector<128x32xf32>
    %c0_1 = arith.constant 0 : index
    %c0_2 = arith.constant 0 : index
    %1 = vector.load %arg2[%c0_1, %c0_2] : memref<32x64xf32, #tpu.memory_space<vmem>>, vector<32x64xf32>
    %cst = arith.constant dense<0.000000e+00> : vector<128x64xf32>
    %2 = tpu.matmul %0, %1, %cst {dimension_numbers = #tpu.dot_dimension_numbers<[1], [0], [0], [1], [0, 0, 1, 1], [], []>} : vector<128x32xf32>, vector<32x64xf32>, vector<128x64xf32> -> vector<128x64xf32>
    %cst_3 = arith.constant 0.000000e+00 : f32
    %3 = vector.broadcast %cst_3 : f32 to vector<128x64xf32>
    %4 = arith.maximumf %2, %3 : vector<128x64xf32>
    %c0_4 = arith.constant 0 : index
    %c0_5 = arith.constant 0 : index
    %5 = vector.load %arg3[%c0_4, %c0_5] : memref<64x64xf32, #tpu.memory_space<vmem>>, vector<64x64xf32>
    %cst_6 = arith.constant dense<0.000000e+00> : vector<128x64xf32>
    %6 = tpu.matmul %4, %5, %cst_6 {dimension_numbers = #tpu.dot_dimension_numbers<[1], [0], [0], [1], [0, 0, 1, 1], [], []>} : vector<128x64xf32>, vector<64x64xf32>, vector<128x64xf32> -> vector<128x64xf32>
    %cst_7 = arith.constant 0.000000e+00 : f32
    %7 = vector.broadcast %cst_7 : f32 to vector<128x64xf32>
    %8 = arith.maximumf %6, %7 : vector<128x64xf32>
    %c0_8 = arith.constant 0 : index
    %c0_9 = arith.constant 0 : index
    %9 = vector.load %arg4[%c0_8, %c0_9] : memref<64x128xf32, #tpu.memory_space<vmem>>, vector<64x128xf32>
    %cst_10 = arith.constant dense<0.000000e+00> : vector<128x128xf32>
    %10 = tpu.matmul %8, %9, %cst_10 {dimension_numbers = #tpu.dot_dimension_numbers<[1], [0], [0], [1], [0, 0, 1, 1], [], []>} : vector<128x64xf32>, vector<64x128xf32>, vector<128x128xf32> -> vector<128x128xf32>
    %c0_11 = arith.constant 0 : index
    %c0_12 = arith.constant 0 : index
    %11 = vector.load %arg5[%c0_11, %c0_12] : memref<128x128xf32, #tpu.memory_space<vmem>>, vector<128x128xf32>
    tpu.vector_store %arg5[%c0_11, %c0_12], %10 {strides = array<i32>} : memref<128x128xf32, #tpu.memory_space<vmem>>, vector<128x128xf32>,
    return
  }
  func.func @transform_0(%arg0: i32) -> (i32, i32) {
    %c0_i32 = arith.constant 0 : i32
    %c0_i32_0 = arith.constant 0 : i32
    return %arg0, %c0_i32 : i32, i32
  }
  func.func @transform_1(%arg0: i32) -> (i32, i32) {
    %c0_i32 = arith.constant 0 : i32
    %c0_i32_0 = arith.constant 0 : i32
    %c0_i32_1 = arith.constant 0 : i32
    return %c0_i32, %c0_i32_0 : i32, i32
  }
  func.func @transform_2(%arg0: i32) -> (i32, i32) {
    %c0_i32 = arith.constant 0 : i32
    %c0_i32_0 = arith.constant 0 : i32
    %c0_i32_1 = arith.constant 0 : i32
    return %c0_i32, %c0_i32_0 : i32, i32
  }
  func.func @transform_3(%arg0: i32) -> (i32, i32) {
    %c0_i32 = arith.constant 0 : i32
    %c0_i32_0 = arith.constant 0 : i32
    %c0_i32_1 = arith.constant 0 : i32
    return %c0_i32, %c0_i32_0 : i32, i32
  }
  func.func @transform_4(%arg0: i32) -> (i32, i32) {
    %c0_i32 = arith.constant 0 : i32
    %c0_i32_0 = arith.constant 0 : i32
    return %arg0, %c0_i32 : i32, i32
  }
}

</mosaic_0001>

<llo_original>
// kernel: mlp_decoder_forward.1
$region0: #{mlp_decoder_forward.1}
  #allocation0 [shape = 'u32[]', space=smem, size = 0x4, offset = 0x4, fixed_abs, tag = 'smem constant byte address 0x4 - core index']
  #allocation1 [shape = 'u32[144,128]{1,0:T(1,128)}', space=vmem, size = 0x12000, scoped, tag = 'internal scratch']
  %s0 = inlined_call_operand.vmem [shape: f32[256,32], index: 0, kind: input, shape index: {}]
  %s1 = inlined_call_operand.vmem [shape: f32[32,64], index: 1, kind: input, shape index: {}]
  %s2 = inlined_call_operand.vmem [shape: f32[64,64], index: 2, kind: input, shape index: {}]
  %s3 = inlined_call_operand.vmem [shape: f32[64,128], index: 3, kind: input, shape index: {}]
  %s4 = inlined_call_operand.hbm [shape: f32[256,128], index: 4, kind: output, shape index: {}]
  %s5 = sld [smem:[#allocation0]]
  $region49: #{mlp_decoder_forward.1} parent=0
    _
  %s7 = ssub.s32 1, %s5
  %s8 = scalar_select 0, %s7, %s5
  $region1: #{mlp_decoder_forward.1} parent=0
    #allocation2 [shape = 'u8[131072]{0}', space=vmem, size = 0x20000, scoped, tag = 'output window, operand 0']
    #allocation3 [shape = 's32[2]{0}', space=sflag, size = 0x8, scoped, tag = 'scoped memory for mlp_decoder_forward.1']
    %9 = vsyncpa [#allocation3], 0
    %s10 = scalar_lea.sflag [#allocation3], 1
    %11 = vsyncpa %s10, 0
    loop: start=0, step=1, limit=4
    $region2: #{mlp_decoder_forward.1} parent=1 // loop_pre_header
      _
    $region3: #{mlp_decoder_forward.1} parent=1 // loop_header
      %s13 = sphi 0, %s17
      %p14 = scmp.ge.s32.totalorder %s13, 4
      %s23 = sphi 0, %s25
      %s26 = sphi 0, %s23
      %s27 = sphi 0, %s26
      %s43 = sphi 0, %s27
      %s47 = sphi 0, %s47
      %s49 = sphi 0, %s47
      %s50 = sphi 0, %s49
      %s64 = sphi 0, %s50
      %s68 = sphi 0, %s68
      %s70 = sphi 0, %s68
      %s71 = sphi 0, %s70
      %s85 = sphi 0, %s71
      %s89 = sphi 0, %s89
      %s91 = sphi 0, %s89
      %s92 = sphi 0, %s91
      %s106 = sphi 0, %s92
      %s112 = sphi 0, %s114
      %s115 = sphi 0, %s112
      %s116 = sphi 0, %s115
      %s132 = sphi 0, %s116
    $region4: #{mlp_decoder_forward.1} parent=1 // loop_header_branch
      %16 = sbr.rel (%p14) target = $region8
    $region5: #{mlp_decoder_forward.1} parent=1 // loop_body
      %s18 = ssub.s32 %s13, 1
      %s19 = ssub.s32 %s13, 2
      %s20 = sadd.s32 %s13, 1
      %s21 = ssub.s32 %s13, %s20
      %p22 = scmp.eq.s32.totalorder %s21, 0
      %s24 = sadd.s32 %s23, 1
      %s25 = scalar_select %p22, %s23, %s24
      %p28 = pneg %p22
      %p29 = scmp.eq.s32.totalorder %s13, 1
      %p30 = por %p28, %p29
      %p31 = scmp.ne.s32.totalorder %s23, %s26
      %p32 = scmp.eq.s32.totalorder %s13, 0
      %p33 = por %p31, %p32
      %p34 = scmp.ne.s32.totalorder %s23, %s26
      %p35 = scmp.eq.s32.totalorder %s18, 1
      %p36 = por %p34, %p35
      %p37 = scmp.ne.s32.totalorder %s26, %s27
      %p38 = scmp.eq.s32.totalorder %s18, 0
      %p39 = por %p37, %p38
      %p40 = scmp.ne.s32.totalorder %s26, %s27
      %p41 = scmp.eq.s32.totalorder %s19, 1
      %p42 = por %p40, %p41
      %p44 = scmp.ne.s32.totalorder %s27, %s43
      %p45 = scmp.eq.s32.totalorder %s19, 0
      %p46 = por %p44, %p45
      %s48 = sadd.s32 %s47, 1
      %p51 = scmp.eq.s32.totalorder %s13, 1
      %p52 = scmp.ne.s32.totalorder %s47, %s49
      %p53 = scmp.eq.s32.totalorder %s13, 0
      %p54 = por %p52, %p53
      %p55 = scmp.ne.s32.totalorder %s47, %s49
      %p56 = scmp.eq.s32.totalorder %s18, 1
      %p57 = por %p55, %p56
      %p58 = scmp.ne.s32.totalorder %s49, %s50
      %p59 = scmp.eq.s32.totalorder %s18, 0
      %p60 = por %p58, %p59
      %p61 = scmp.ne.s32.totalorder %s49, %s50
      %p62 = scmp.eq.s32.totalorder %s19, 1
      %p63 = por %p61, %p62
      %p65 = scmp.ne.s32.totalorder %s50, %s64
      %p66 = scmp.eq.s32.totalorder %s19, 0
      %p67 = por %p65, %p66
      %s69 = sadd.s32 %s68, 1
      %p72 = scmp.eq.s32.totalorder %s13, 1
      %p73 = scmp.ne.s32.totalorder %s68, %s70
      %p74 = scmp.eq.s32.totalorder %s13, 0
      %p75 = por %p73, %p74
      %p76 = scmp.ne.s32.totalorder %s68, %s70
      %p77 = scmp.eq.s32.totalorder %s18, 1
      %p78 = por %p76, %p77
      %p79 = scmp.ne.s32.totalorder %s70, %s71
      %p80 = scmp.eq.s32.totalorder %s18, 0
      %p81 = por %p79, %p80
      %p82 = scmp.ne.s32.totalorder %s70, %s71
      %p83 = scmp.eq.s32.totalorder %s19, 1
      %p84 = por %p82, %p83
      %p86 = scmp.ne.s32.totalorder %s71, %s85
      %p87 = scmp.eq.s32.totalorder %s19, 0
      %p88 = por %p86, %p87
      %s90 = sadd.s32 %s89, 1
      %p93 = scmp.eq.s32.totalorder %s13, 1
      %p94 = scmp.ne.s32.totalorder %s89, %s91
      %p95 = scmp.eq.s32.totalorder %s13, 0
      %p96 = por %p94, %p95
      %p97 = scmp.ne.s32.totalorder %s89, %s91
      %p98 = scmp.eq.s32.totalorder %s18, 1
      %p99 = por %p97, %p98
      %p100 = scmp.ne.s32.totalorder %s91, %s92
      %p101 = scmp.eq.s32.totalorder %s18, 0
      %p102 = por %p100, %p101
      %p103 = scmp.ne.s32.totalorder %s91, %s92
      %p104 = scmp.eq.s32.totalorder %s19, 1
      %p105 = por %p103, %p104
      %p107 = scmp.ne.s32.totalorder %s92, %s106
      %p108 = scmp.eq.s32.totalorder %s19, 0
      %p109 = por %p107, %p108
      %s110 = ssub.s32 %s13, %s20
      %p111 = scmp.eq.s32.totalorder %s110, 0
      %s113 = sadd.s32 %s112, 1
      %s114 = scalar_select %p111, %s112, %s113
      %p117 = pneg %p111
      %p118 = scmp.eq.s32.totalorder %s13, 1
      %p119 = por %p117, %p118
      %p120 = scmp.ne.s32.totalorder %s112, %s115
      %p121 = scmp.eq.s32.totalorder %s13, 0
      %p122 = por %p120, %p121
      %p123 = scmp.ne.s32.totalorder %s112, %s115
      %p124 = scmp.eq.s32.totalorder %s18, 1
      %p125 = por %p123, %p124
      %p126 = scmp.ne.s32.totalorder %s115, %s116
      %p127 = scmp.eq.s32.totalorder %s18, 0
      %p128 = por %p126, %p127
      %p129 = scmp.ne.s32.totalorder %s115, %s116
      %p130 = scmp.eq.s32.totalorder %s19, 1
      %p131 = por %p129, %p130
      %p133 = scmp.ne.s32.totalorder %s116, %s132
      %p134 = scmp.eq.s32.totalorder %s19, 0
      %p135 = por %p133, %p134
      %p136 = scmp.le.s32.totalorder 1, %s13
      %p137 = scmp.lt.s32.totalorder %s13, 3
      %p138 = pnand %p136, %p137
      %p139 = pneg %p138
      // Predicated region
      $region9: #{mlp_decoder_forward.1} parent=5 // pred_check
        _
      $region10: #{mlp_decoder_forward.1} parent=5 // pred_check_branch
        %141 = sbr.rel (%p138) target = $region12
      $region11: #{mlp_decoder_forward.1} parent=5 // pred_region
        %s142 = ssub.s32 %s13, 1
        // Predicated region
        $region13: #{mlp_decoder_forward.1} parent=11 // pred_check
          %p143 = pneg %p60
        $region14: #{mlp_decoder_forward.1} parent=11 // pred_check_branch
          %145 = sbr.rel (%p143) target = $region16
        $region15: #{mlp_decoder_forward.1} parent=11 // pred_region
          _
        $region16: #{mlp_decoder_forward.1} parent=11 // pred_fallthru
          _
        // Predicated region
        $region17: #{mlp_decoder_forward.1} parent=11 // pred_check
          %p146 = pneg %p81
        $region18: #{mlp_decoder_forward.1} parent=11 // pred_check_branch
          %148 = sbr.rel (%p146) target = $region20
        $region19: #{mlp_decoder_forward.1} parent=11 // pred_region
          _
        $region20: #{mlp_decoder_forward.1} parent=11 // pred_fallthru
          _
        // Predicated region
        $region21: #{mlp_decoder_forward.1} parent=11 // pred_check
          %p149 = pneg %p102
        $region22: #{mlp_decoder_forward.1} parent=11 // pred_check_branch
          %151 = sbr.rel (%p149) target = $region24
        $region23: #{mlp_decoder_forward.1} parent=11 // pred_region
          _
        $region24: #{mlp_decoder_forward.1} parent=11 // pred_fallthru
          _
      $region12: #{mlp_decoder_forward.1} parent=5 // pred_fallthru
        _
      %p152 = scmp.lt.s32.totalorder %s13, 2
      // Predicated region
      $region25: #{mlp_decoder_forward.1} parent=5 // pred_check
        %p153 = pneg %p152
      $region26: #{mlp_decoder_forward.1} parent=5 // pred_check_branch
        %155 = sbr.rel (%p153) target = $region28
      $region27: #{mlp_decoder_forward.1} parent=5 // pred_region
        // Predicated region
        $region29: #{mlp_decoder_forward.1} parent=27 // pred_check
          %p156 = pneg %p33
        $region30: #{mlp_decoder_forward.1} parent=27 // pred_check_branch
          %158 = sbr.rel (%p156) target = $region32
        $region31: #{mlp_decoder_forward.1} parent=27 // pred_region
          %s159 = smul.u32 16, %s13
          %p160 = scmp.lt.s32.totalorder %s159, 31
          %s161 = scalar_select %p160, %s159, 31
          %s162 = smul.addr %s161, 8
          %s163 = scalar_lea.vmem %s0, %s162
          %s164 = smul.u32 16, %s13
        $region32: #{mlp_decoder_forward.1} parent=27 // pred_fallthru
          _
      $region28: #{mlp_decoder_forward.1} parent=5 // pred_fallthru
        _
      %p165 = scmp.le.s32.totalorder 1, %s13
      %p166 = scmp.lt.s32.totalorder %s13, 3
      %p167 = pnand %p165, %p166
      %p168 = pneg %p167
      // Predicated region
      $region33: #{mlp_decoder_forward.1} parent=5 // pred_check
        _
      $region34: #{mlp_decoder_forward.1} parent=5 // pred_check_branch
        %170 = sbr.rel (%p167) target = $region36
      $region35: #{mlp_decoder_forward.1} parent=5 // pred_region
        %s171 = ssub.s32 %s13, 1
        %s172 = smul.u32 16, %s18
        %p173 = scmp.lt.s32.totalorder %s172, 31
        %s174 = scalar_select %p173, %s172, 31
        %s175 = smul.addr %s174, 8
        %s176 = scalar_lea.vmem %s0, %s175
        %p177 = pneg %p39
        %p178 = pneg %p36
        %p179 = pneg %p60
        %p180 = pneg %p57
        %p181 = pneg %p81
        %p182 = pneg %p78
        %p183 = pneg %p102
        %p184 = pneg %p99
        %p185 = pneg %p128
        %p186 = pneg %p125
        %s187 = sand.u32 %s115, 1
        %s188 = scalar_lea.sflag [#allocation3], %s187
        %s189 = sand.u32 %s115, 1
        %s190 = smul.addr %s189, 128
        %s191 = scalar_lea.vmem [#allocation2], %s190
        %s192 = smul.u32 16, %s18
        %p193 = scmp.lt.s32.totalorder %s192, 31
        %s194 = scalar_select %p193, %s192, 31
        %s195 = smul.addr %s194, 8
        %s196 = scalar_lea.vmem %s0, %s195
        %s197 = smul.u32 16, %s18
        %s198 = smul.u32 16, %s18
        %v199 = vld [vmem:[%s196] sm:$0xff]
        %v200 = vld [vmem:[%s196 + $0x8] sm:$0xff]
        %v201 = vld [vmem:[%s196 + $0x10] sm:$0xff]
        %v202 = vld [vmem:[%s196 + $0x18] sm:$0xff]
        %v203 = vld [vmem:[%s196 + $0x20] sm:$0xff]
        %v204 = vld [vmem:[%s196 + $0x28] sm:$0xff]
        %v205 = vld [vmem:[%s196 + $0x30] sm:$0xff]
        %v206 = vld [vmem:[%s196 + $0x38] sm:$0xff]
        %v207 = vld [vmem:[%s196 + $0x40] sm:$0xff]
        %v208 = vld [vmem:[%s196 + $0x48] sm:$0xff]
        %v209 = vld [vmem:[%s196 + $0x50] sm:$0xff]
        %v210 = vld [vmem:[%s196 + $0x58] sm:$0xff]
        %v211 = vld [vmem:[%s196 + $0x60] sm:$0xff]
        %v212 = vld [vmem:[%s196 + $0x68] sm:$0xff]
        %v213 = vld [vmem:[%s196 + $0x70] sm:$0xff]
        %v214 = vld [vmem:[%s196 + $0x78] sm:$0xff]
        %v215 = vld [vmem:[%s1] sm:$0xff]
        %v216 = vld [vmem:[%s1 + $0x8] sm:$0xff]
        %v217 = vld [vmem:[%s1 + $0x10] sm:$0xff]
        %v218 = vld [vmem:[%s1 + $0x18] sm:$0xff]
        %vm219 = vcmask 261120
        %v221 = vsel %vm219, %v199, 0
        %v224 = vsel %vm219, %v200, 0
        %v227 = vsel %vm219, %v201, 0
        %v230 = vsel %vm219, %v202, 0
        %v233 = vsel %vm219, %v203, 0
        %v236 = vsel %vm219, %v204, 0
        %v239 = vsel %vm219, %v205, 0
        %v242 = vsel %vm219, %v206, 0
        %v245 = vsel %vm219, %v207, 0
        %v248 = vsel %vm219, %v208, 0
        %v251 = vsel %vm219, %v209, 0
        %v254 = vsel %vm219, %v210, 0
        %v257 = vsel %vm219, %v211, 0
        %v260 = vsel %vm219, %v212, 0
        %v263 = vsel %vm219, %v213, 0
        %v266 = vsel %vm219, %v214, 0
        %268 = vmatprep.subr.mxu0 0.0
        %269 = vmatpush1.msra.mxu0 %v215
        %270 = vmatprep.subr.mxu0 0.0
        %271 = vmatpush1.msra.mxu0 %v216
        %272 = vmatprep.subr.mxu0 0.0
        %273 = vmatpush1.msra.mxu0 %v217
        %274 = vmatprep.subr.mxu0 0.0
        %275 = vmatpush1.msra.mxu0 %v218
        %276 = vmatprep.subr.mxu0 0.0
        %277 = vmatpush1.msra.mxu0 0.0
        %278 = vmatprep.subr.mxu0 0.0
        %279 = vmatpush1.msra.mxu0 0.0
        %280 = vmatprep.subr.mxu0 0.0
        %281 = vmatpush1.msra.mxu0 0.0
        %282 = vmatprep.subr.mxu0 0.0
        %283 = vmatpush1.msra.mxu0 0.0
        %284 = vmatprep.subr.mxu0 0.0
        %285 = vmatpush1.msra.mxu0 0.0
        %286 = vmatprep.subr.mxu0 0.0
        %287 = vmatpush1.msra.mxu0 0.0
        %288 = vmatprep.subr.mxu0 0.0
        %289 = vmatpush1.msra.mxu0 0.0
        %290 = vmatprep.subr.mxu0 0.0
        %291 = vmatpush1.msra.mxu0 0.0
        %292 = vmatprep.subr.mxu0 0.0
        %293 = vmatpush1.msra.mxu0 0.0
        %294 = vmatprep.subr.mxu0 0.0
        %295 = vmatpush1.msra.mxu0 0.0
        %296 = vmatprep.subr.mxu0 0.0
        %297 = vmatpush1.msra.mxu0 0.0
        %298 = vmatprep.subr.mxu0 0.0
        %299 = vmatpush1.msra.mxu0 0.0
        %300 = vmatprep.subr.mxu0 0.0
        %301 = vmatpush1.msra.mxu0 0.0
        %302 = vmatprep.subr.mxu0 0.0
        %303 = vmatpush1.msra.mxu0 0.0
        %304 = vmatprep.subr.mxu0 0.0
        %305 = vmatpush1.msra.mxu0 0.0
        %306 = vmatprep.subr.mxu0 0.0
        %307 = vmatpush1.msra.mxu0 0.0
        %308 = vmatprep.subr.mxu0 0.0
        %309 = vmatpush1.msra.mxu0 0.0
        %310 = vmatprep.subr.mxu0 0.0
        %311 = vmatpush1.msra.mxu0 0.0
        %312 = vmatprep.subr.mxu0 0.0
        %313 = vmatpush1.msra.mxu0 0.0
        %314 = vmatprep.subr.mxu0 0.0
        %315 = vmatpush1.msra.mxu0 0.0
        %316 = vmatprep.subr.mxu0 0.0
        %317 = vmatpush1.msra.mxu0 0.0
        %318 = vmatprep.subr.mxu0 0.0
        %319 = vmatpush1.msra.mxu0 0.0
        %320 = vmatprep.subr.mxu0 0.0
        %321 = vmatpush1.msra.mxu0 0.0
        %322 = vmatprep.subr.mxu0 0.0
        %323 = vmatpush1.msra.mxu0 0.0
        %324 = vmatprep.subr.mxu0 0.0
        %325 = vmatpush1.msra.mxu0 0.0
        %326 = vmatprep.subr.mxu0 0.0
        %327 = vmatpush1.msra.mxu0 0.0
        %328 = vmatprep.subr.mxu0 0.0
        %329 = vmatpush1.msra.mxu0 0.0
        %330 = vmatprep.subr.mxu0 0.0
        %331 = vmatpush1.msra.mxu0 0.0
        %332 = vmatprep.mubr.f32.mxu0 0.0
        %333 = vmatmul.mubr.f32.gmra.mrb[0].mxu0 %v221
        %v334 = vpop.f32.mrb[0].mxu0
        %v335 = vadd.f32 0.0, %v334
        %v336 = vpop.f32.mrb[0].mxu0
        %337 = vmatprep.mubr.f32.mxu0 0.0
        %338 = vmatmul.mubr.f32.gmra.mrb[0].mxu0 %v224
        %v339 = vpop.f32.mrb[0].mxu0
        %v340 = vadd.f32 0.0, %v339
        %v341 = vpop.f32.mrb[0].mxu0
        %342 = vmatprep.mubr.f32.mxu0 0.0
        %343 = vmatmul.mubr.f32.gmra.mrb[0].mxu0 %v227
        %v344 = vpop.f32.mrb[0].mxu0
        %v345 = vadd.f32 0.0, %v344
        %v346 = vpop.f32.mrb[0].mxu0
        %347 = vmatprep.mubr.f32.mxu0 0.0
        %348 = vmatmul.mubr.f32.gmra.mrb[0].mxu0 %v230
        %v349 = vpop.f32.mrb[0].mxu0
        %v350 = vadd.f32 0.0, %v349
        %v351 = vpop.f32.mrb[0].mxu0
        %352 = vmatprep.mubr.f32.mxu0 0.0
        %353 = vmatmul.mubr.f32.gmra.mrb[0].mxu0 %v233
        %v354 = vpop.f32.mrb[0].mxu0
        %v355 = vadd.f32 0.0, %v354
        %v356 = vpop.f32.mrb[0].mxu0
        %357 = vmatprep.mubr.f32.mxu0 0.0
        %358 = vmatmul.mubr.f32.gmra.mrb[0].mxu0 %v236
        %v359 = vpop.f32.mrb[0].mxu0
        %v360 = vadd.f32 0.0, %v359
        %v361 = vpop.f32.mrb[0].mxu0
        %362 = vmatprep.mubr.f32.mxu0 0.0
        %363 = vmatmul.mubr.f32.gmra.mrb[0].mxu0 %v239
        %v364 = vpop.f32.mrb[0].mxu0
        %v365 = vadd.f32 0.0, %v364
        %v366 = vpop.f32.mrb[0].mxu0
        %367 = vmatprep.mubr.f32.mxu0 0.0
        %368 = vmatmul.mubr.f32.gmra.mrb[0].mxu0 %v242
        %v369 = vpop.f32.mrb[0].mxu0
        %v370 = vadd.f32 0.0, %v369
        %v371 = vpop.f32.mrb[0].mxu0
        %372 = vmatprep.mubr.f32.mxu0 0.0
        %373 = vmatmul.mubr.f32.gmra.mrb[0].mxu0 %v245
        %v374 = vpop.f32.mrb[0].mxu0
        %v375 = vadd.f32 0.0, %v374
        %v376 = vpop.f32.mrb[0].mxu0
        %377 = vmatprep.mubr.f32.mxu0 0.0
        %378 = vmatmul.mubr.f32.gmra.mrb[0].mxu0 %v248
        %v379 = vpop.f32.mrb[0].mxu0
        %v380 = vadd.f32 0.0, %v379
        %v381 = vpop.f32.mrb[0].mxu0
        %382 = vmatprep.mubr.f32.mxu0 0.0
        %383 = vmatmul.mubr.f32.gmra.mrb[0].mxu0 %v251
        %v384 = vpop.f32.mrb[0].mxu0
        %v385 = vadd.f32 0.0, %v384
        %v386 = vpop.f32.mrb[0].mxu0
        %387 = vmatprep.mubr.f32.mxu0 0.0
        %388 = vmatmul.mubr.f32.gmra.mrb[0].mxu0 %v254
        %v389 = vpop.f32.mrb[0].mxu0
        %v390 = vadd.f32 0.0, %v389
        %v391 = vpop.f32.mrb[0].mxu0
        %392 = vmatprep.mubr.f32.mxu0 0.0
        %393 = vmatmul.mubr.f32.gmra.mrb[0].mxu0 %v257
        %v394 = vpop.f32.mrb[0].mxu0
        %v395 = vadd.f32 0.0, %v394
        %v396 = vpop.f32.mrb[0].mxu0
        %397 = vmatprep.mubr.f32.mxu0 0.0
        %398 = vmatmul.mubr.f32.gmra.mrb[0].mxu0 %v260
        %v399 = vpop.f32.mrb[0].mxu0
        %v400 = vadd.f32 0.0, %v399
        %v401 = vpop.f32.mrb[0].mxu0
        %402 = vmatprep.mubr.f32.mxu0 0.0
        %403 = vmatmul.mubr.f32.gmra.mrb[0].mxu0 %v263
        %v404 = vpop.f32.mrb[0].mxu0
        %v405 = vadd.f32 0.0, %v404
        %v406 = vpop.f32.mrb[0].mxu0
        %407 = vmatprep.mubr.f32.mxu0 0.0
        %408 = vmatmul.mubr.f32.gmra.mrb[0].mxu0 %v266
        %v409 = vpop.f32.mrb[0].mxu0
        %v410 = vadd.f32 0.0, %v409
        %v411 = vpop.f32.mrb[0].mxu0
        %412 = vdwg.mxu0
        %v413 = vmax.f32 %v335, 0.0
        %v414 = vmax.f32 %v340, 0.0
        %v415 = vmax.f32 %v345, 0.0
        %v416 = vmax.f32 %v350, 0.0
        %v417 = vmax.f32 %v355, 0.0
        %v418 = vmax.f32 %v360, 0.0
        %v419 = vmax.f32 %v365, 0.0
        %v420 = vmax.f32 %v370, 0.0
        %v421 = vmax.f32 %v375, 0.0
        %v422 = vmax.f32 %v380, 0.0
        %v423 = vmax.f32 %v385, 0.0
        %v424 = vmax.f32 %v390, 0.0
        %v425 = vmax.f32 %v395, 0.0
        %v426 = vmax.f32 %v400, 0.0
        %v427 = vmax.f32 %v405, 0.0
        %v428 = vmax.f32 %v410, 0.0
        %v429 = vld [vmem:[%s2] sm:$0xff]
        %v430 = vld [vmem:[%s2 + $0x8] sm:$0xff]
        %v431 = vld [vmem:[%s2 + $0x10] sm:$0xff]
        %v432 = vld [vmem:[%s2 + $0x18] sm:$0xff]
        %v433 = vld [vmem:[%s2 + $0x20] sm:$0xff]
        %v434 = vld [vmem:[%s2 + $0x28] sm:$0xff]
        %v435 = vld [vmem:[%s2 + $0x30] sm:$0xff]
        %v436 = vld [vmem:[%s2 + $0x38] sm:$0xff]
        %vm437 = vcmask 523264
        %v439 = vsel %vm437, %v413, 0
        %v442 = vsel %vm437, %v414, 0
        %v445 = vsel %vm437, %v415, 0
        %v448 = vsel %vm437, %v416, 0
        %v451 = vsel %vm437, %v417, 0
        %v454 = vsel %vm437, %v418, 0
        %v457 = vsel %vm437, %v419, 0
        %v460 = vsel %vm437, %v420, 0
        %v463 = vsel %vm437, %v421, 0
        %v466 = vsel %vm437, %v422, 0
        %v469 = vsel %vm437, %v423, 0
        %v472 = vsel %vm437, %v424, 0
        %v475 = vsel %vm437, %v425, 0
        %v478 = vsel %vm437, %v426, 0
        %v481 = vsel %vm437, %v427, 0
        %v484 = vsel %vm437, %v428, 0
        %486 = vmatprep.subr.mxu0 0.0
        %487 = vmatpush1.msra.mxu0 %v429
        %488 = vmatprep.subr.mxu0 0.0
        %489 = vmatpush1.msra.mxu0 %v430
        %490 = vmatprep.subr.mxu0 0.0
        %491 = vmatpush1.msra.mxu0 %v431
        %492 = vmatprep.subr.mxu0 0.0
        %493 = vmatpush1.msra.mxu0 %v432
        %494 = vmatprep.subr.mxu0 0.0
        %495 = vmatpush1.msra.mxu0 %v433
        %496 = vmatprep.subr.mxu0 0.0
        %497 = vmatpush1.msra.mxu0 %v434
        %498 = vmatprep.subr.mxu0 0.0
        %499 = vmatpush1.msra.mxu0 %v435
        %500 = vmatprep.subr.mxu0 0.0
        %501 = vmatpush1.msra.mxu0 %v436
        %502 = vmatprep.subr.mxu0 0.0
        %503 = vmatpush1.msra.mxu0 0.0
        %504 = vmatprep.subr.mxu0 0.0
        %505 = vmatpush1.msra.mxu0 0.0
        %506 = vmatprep.subr.mxu0 0.0
        %507 = vmatpush1.msra.mxu0 0.0
        %508 = vmatprep.subr.mxu0 0.0
        %509 = vmatpush1.msra.mxu0 0.0
        %510 = vmatprep.subr.mxu0 0.0
        %511 = vmatpush1.msra.mxu0 0.0
        %512 = vmatprep.subr.mxu0 0.0
        %513 = vmatpush1.msra.mxu0 0.0
        %514 = vmatprep.subr.mxu0 0.0
        %515 = vmatpush1.msra.mxu0 0.0
        %516 = vmatprep.subr.mxu0 0.0
        %517 = vmatpush1.msra.mxu0 0.0
        %518 = vmatprep.subr.mxu0 0.0
        %519 = vmatpush1.msra.mxu0 0.0
        %520 = vmatprep.subr.mxu0 0.0
        %521 = vmatpush1.msra.mxu0 0.0
        %522 = vmatprep.subr.mxu0 0.0
        %523 = vmatpush1.msra.mxu0 0.0
        %524 = vmatprep.subr.mxu0 0.0
        %525 = vmatpush1.msra.mxu0 0.0
        %526 = vmatprep.subr.mxu0 0.0
        %527 = vmatpush1.msra.mxu0 0.0
        %528 = vmatprep.subr.mxu0 0.0
        %529 = vmatpush1.msra.mxu0 0.0
        %530 = vmatprep.subr.mxu0 0.0
        %531 = vmatpush1.msra.mxu0 0.0
        %532 = vmatprep.subr.mxu0 0.0
        %533 = vmatpush1.msra.mxu0 0.0
        %534 = vmatprep.subr.mxu0 0.0
        %535 = vmatpush1.msra.mxu0 0.0
        %536 = vmatprep.subr.mxu0 0.0
        %537 = vmatpush1.msra.mxu0 0.0
        %538 = vmatprep.subr.mxu0 0.0
        %539 = vmatpush1.msra.mxu0 0.0
        %540 = vmatprep.subr.mxu0 0.0
        %541 = vmatpush1.msra.mxu0 0.0
        %542 = vmatprep.subr.mxu0 0.0
        %543 = vmatpush1.msra.mxu0 0.0
        %544 = vmatprep.subr.mxu0 0.0
        %545 = vmatpush1.msra.mxu0 0.0
        %546 = vmatprep.subr.mxu0 0.0
        %547 = vmatpush1.msra.mxu0 0.0
        %548 = vmatprep.subr.mxu0 0.0
        %549 = vmatpush1.msra.mxu0 0.0
        %550 = vmatprep.mubr.f32.mxu0 0.0
        %551 = vmatmul.mubr.f32.gmra.mrb[0].mxu0 %v439
        %v552 = vpop.f32.mrb[0].mxu0
        %v553 = vadd.f32 0.0, %v552
        %v554 = vpop.f32.mrb[0].mxu0
        %555 = vmatprep.mubr.f32.mxu0 0.0
        %556 = vmatmul.mubr.f32.gmra.mrb[0].mxu0 %v442
        %v557 = vpop.f32.mrb[0].mxu0
        %v558 = vadd.f32 0.0, %v557
        %v559 = vpop.f32.mrb[0].mxu0
        %560 = vmatprep.mubr.f32.mxu0 0.0
        %561 = vmatmul.mubr.f32.gmra.mrb[0].mxu0 %v445
        %v562 = vpop.f32.mrb[0].mxu0
        %v563 = vadd.f32 0.0, %v562
        %v564 = vpop.f32.mrb[0].mxu0
        %565 = vmatprep.mubr.f32.mxu0 0.0
        %566 = vmatmul.mubr.f32.gmra.mrb[0].mxu0 %v448
        %v567 = vpop.f32.mrb[0].mxu0
        %v568 = vadd.f32 0.0, %v567
        %v569 = vpop.f32.mrb[0].mxu0
        %570 = vmatprep.mubr.f32.mxu0 0.0
        %571 = vmatmul.mubr.f32.gmra.mrb[0].mxu0 %v451
        %v572 = vpop.f32.mrb[0].mxu0
        %v573 = vadd.f32 0.0, %v572
        %v574 = vpop.f32.mrb[0].mxu0
        %575 = vmatprep.mubr.f32.mxu0 0.0
        %576 = vmatmul.mubr.f32.gmra.mrb[0].mxu0 %v454
        %v577 = vpop.f32.mrb[0].mxu0
        %v578 = vadd.f32 0.0, %v577
        %v579 = vpop.f32.mrb[0].mxu0
        %580 = vmatprep.mubr.f32.mxu0 0.0
        %581 = vmatmul.mubr.f32.gmra.mrb[0].mxu0 %v457
        %v582 = vpop.f32.mrb[0].mxu0
        %v583 = vadd.f32 0.0, %v582
        %v584 = vpop.f32.mrb[0].mxu0
        %585 = vmatprep.mubr.f32.mxu0 0.0
        %586 = vmatmul.mubr.f32.gmra.mrb[0].mxu0 %v460
        %v587 = vpop.f32.mrb[0].mxu0
        %v588 = vadd.f32 0.0, %v587
        %v589 = vpop.f32.mrb[0].mxu0
        %590 = vmatprep.mubr.f32.mxu0 0.0
        %591 = vmatmul.mubr.f32.gmra.mrb[0].mxu0 %v463
        %v592 = vpop.f32.mrb[0].mxu0
        %v593 = vadd.f32 0.0, %v592
        %v594 = vpop.f32.mrb[0].mxu0
        %595 = vmatprep.mubr.f32.mxu0 0.0
        %596 = vmatmul.mubr.f32.gmra.mrb[0].mxu0 %v466
        %v597 = vpop.f32.mrb[0].mxu0
        %v598 = vadd.f32 0.0, %v597
        %v599 = vpop.f32.mrb[0].mxu0
        %600 = vmatprep.mubr.f32.mxu0 0.0
        %601 = vmatmul.mubr.f32.gmra.mrb[0].mxu0 %v469
        %v602 = vpop.f32.mrb[0].mxu0
        %v603 = vadd.f32 0.0, %v602
        %v604 = vpop.f32.mrb[0].mxu0
        %605 = vmatprep.mubr.f32.mxu0 0.0
        %606 = vmatmul.mubr.f32.gmra.mrb[0].mxu0 %v472
        %v607 = vpop.f32.mrb[0].mxu0
        %v608 = vadd.f32 0.0, %v607
        %v609 = vpop.f32.mrb[0].mxu0
        %610 = vmatprep.mubr.f32.mxu0 0.0
        %611 = vmatmul.mubr.f32.gmra.mrb[0].mxu0 %v475
        %v612 = vpop.f32.mrb[0].mxu0
        %v613 = vadd.f32 0.0, %v612
        %v614 = vpop.f32.mrb[0].mxu0
        %615 = vmatprep.mubr.f32.mxu0 0.0
        %616 = vmatmul.mubr.f32.gmra.mrb[0].mxu0 %v478
        %v617 = vpop.f32.mrb[0].mxu0
        %v618 = vadd.f32 0.0, %v617
        %v619 = vpop.f32.mrb[0].mxu0
        %620 = vmatprep.mubr.f32.mxu0 0.0
        %621 = vmatmul.mubr.f32.gmra.mrb[0].mxu0 %v481
        %v622 = vpop.f32.mrb[0].mxu0
        %v623 = vadd.f32 0.0, %v622
        %v624 = vpop.f32.mrb[0].mxu0
        %625 = vmatprep.mubr.f32.mxu0 0.0
        %626 = vmatmul.mubr.f32.gmra.mrb[0].mxu0 %v484
        %v627 = vpop.f32.mrb[0].mxu0
        %v628 = vadd.f32 0.0, %v627
        %v629 = vpop.f32.mrb[0].mxu0
        %630 = vdwg.mxu0
        %v631 = vmax.f32 %v553, 0.0
        %v632 = vmax.f32 %v558, 0.0
        %v633 = vmax.f32 %v563, 0.0
        %v634 = vmax.f32 %v568, 0.0
        %v635 = vmax.f32 %v573, 0.0
        %v636 = vmax.f32 %v578, 0.0
        %v637 = vmax.f32 %v583, 0.0
        %v638 = vmax.f32 %v588, 0.0
        %v639 = vmax.f32 %v593, 0.0
        %v640 = vmax.f32 %v598, 0.0
        %v641 = vmax.f32 %v603, 0.0
        %v642 = vmax.f32 %v608, 0.0
        %v643 = vmax.f32 %v613, 0.0
        %v644 = vmax.f32 %v618, 0.0
        %v645 = vmax.f32 %v623, 0.0
        %v646 = vmax.f32 %v628, 0.0
        %v647 = vld [vmem:[%s3] sm:$0xff]
        %v648 = vld [vmem:[%s3 + $0x8] sm:$0xff]
        %v649 = vld [vmem:[%s3 + $0x10] sm:$0xff]
        %v650 = vld [vmem:[%s3 + $0x18] sm:$0xff]
        %v651 = vld [vmem:[%s3 + $0x20] sm:$0xff]
        %v652 = vld [vmem:[%s3 + $0x28] sm:$0xff]
        %v653 = vld [vmem:[%s3 + $0x30] sm:$0xff]
        %v654 = vld [vmem:[%s3 + $0x38] sm:$0xff]
        %v656 = vsel %vm437, %v631, 0
        %v659 = vsel %vm437, %v632, 0
        %v662 = vsel %vm437, %v633, 0
        %v665 = vsel %vm437, %v634, 0
        %v668 = vsel %vm437, %v635, 0
        %v671 = vsel %vm437, %v636, 0
        %v674 = vsel %vm437, %v637, 0
        %v677 = vsel %vm437, %v638, 0
        %v680 = vsel %vm437, %v639, 0
        %v683 = vsel %vm437, %v640, 0
        %v686 = vsel %vm437, %v641, 0
        %v689 = vsel %vm437, %v642, 0
        %v692 = vsel %vm437, %v643, 0
        %v695 = vsel %vm437, %v644, 0
        %v698 = vsel %vm437, %v645, 0
        %v701 = vsel %vm437, %v646, 0
        %703 = vmatprep.subr.mxu0 0.0
        %704 = vmatpush1.msra.mxu0 %v647
        %705 = vmatprep.subr.mxu0 0.0
        %706 = vmatpush1.msra.mxu0 %v648
        %707 = vmatprep.subr.mxu0 0.0
        %708 = vmatpush1.msra.mxu0 %v649
        %709 = vmatprep.subr.mxu0 0.0
        %710 = vmatpush1.msra.mxu0 %v650
        %711 = vmatprep.subr.mxu0 0.0
        %712 = vmatpush1.msra.mxu0 %v651
        %713 = vmatprep.subr.mxu0 0.0
        %714 = vmatpush1.msra.mxu0 %v652
        %715 = vmatprep.subr.mxu0 0.0
        %716 = vmatpush1.msra.mxu0 %v653
        %717 = vmatprep.subr.mxu0 0.0
        %718 = vmatpush1.msra.mxu0 %v654
        %719 = vmatprep.subr.mxu0 0.0
        %720 = vmatpush1.msra.mxu0 0.0
        %721 = vmatprep.subr.mxu0 0.0
        %722 = vmatpush1.msra.mxu0 0.0
        %723 = vmatprep.subr.mxu0 0.0
        %724 = vmatpush1.msra.mxu0 0.0
        %725 = vmatprep.subr.mxu0 0.0
        %726 = vmatpush1.msra.mxu0 0.0
        %727 = vmatprep.subr.mxu0 0.0
        %728 = vmatpush1.msra.mxu0 0.0
        %729 = vmatprep.subr.mxu0 0.0
        %730 = vmatpush1.msra.mxu0 0.0
        %731 = vmatprep.subr.mxu0 0.0
        %732 = vmatpush1.msra.mxu0 0.0
        %733 = vmatprep.subr.mxu0 0.0
        %734 = vmatpush1.msra.mxu0 0.0
        %735 = vmatprep.subr.mxu0 0.0
        %736 = vmatpush1.msra.mxu0 0.0
        %737 = vmatprep.subr.mxu0 0.0
        %738 = vmatpush1.msra.mxu0 0.0
        %739 = vmatprep.subr.mxu0 0.0
        %740 = vmatpush1.msra.mxu0 0.0
        %741 = vmatprep.subr.mxu0 0.0
        %742 = vmatpush1.msra.mxu0 0.0
        %743 = vmatprep.subr.mxu0 0.0
        %744 = vmatpush1.msra.mxu0 0.0
        %745 = vmatprep.subr.mxu0 0.0
        %746 = vmatpush1.msra.mxu0 0.0
        %747 = vmatprep.subr.mxu0 0.0
        %748 = vmatpush1.msra.mxu0 0.0
        %749 = vmatprep.subr.mxu0 0.0
        %750 = vmatpush1.msra.mxu0 0.0
        %751 = vmatprep.subr.mxu0 0.0
        %752 = vmatpush1.msra.mxu0 0.0
        %753 = vmatprep.subr.mxu0 0.0
        %754 = vmatpush1.msra.mxu0 0.0
        %755 = vmatprep.subr.mxu0 0.0
        %756 = vmatpush1.msra.mxu0 0.0
        %757 = vmatprep.subr.mxu0 0.0
        %758 = vmatpush1.msra.mxu0 0.0
        %759 = vmatprep.subr.mxu0 0.0
        %760 = vmatpush1.msra.mxu0 0.0
        %761 = vmatprep.subr.mxu0 0.0
        %762 = vmatpush1.msra.mxu0 0.0
        %763 = vmatprep.subr.mxu0 0.0
        %764 = vmatpush1.msra.mxu0 0.0
        %765 = vmatprep.subr.mxu0 0.0
        %766 = vmatpush1.msra.mxu0 0.0
        %767 = vmatprep.mubr.f32.mxu0 0.0
        %768 = vmatmul.mubr.f32.gmra.mrb[0].mxu0 %v656
        %v769 = vpop.f32.mrb[0].mxu0
        %v770 = vadd.f32 0.0, %v769
        %v771 = vpop.f32.mrb[0].mxu0
        %772 = vmatprep.mubr.f32.mxu0 0.0
        %773 = vmatmul.mubr.f32.gmra.mrb[0].mxu0 %v659
        %v774 = vpop.f32.mrb[0].mxu0
        %v775 = vadd.f32 0.0, %v774
        %v776 = vpop.f32.mrb[0].mxu0
        %777 = vmatprep.mubr.f32.mxu0 0.0
        %778 = vmatmul.mubr.f32.gmra.mrb[0].mxu0 %v662
        %v779 = vpop.f32.mrb[0].mxu0
        %v780 = vadd.f32 0.0, %v779
        %v781 = vpop.f32.mrb[0].mxu0
        %782 = vmatprep.mubr.f32.mxu0 0.0
        %783 = vmatmul.mubr.f32.gmra.mrb[0].mxu0 %v665
        %v784 = vpop.f32.mrb[0].mxu0
        %v785 = vadd.f32 0.0, %v784
        %v786 = vpop.f32.mrb[0].mxu0
        %787 = vmatprep.mubr.f32.mxu0 0.0
        %788 = vmatmul.mubr.f32.gmra.mrb[0].mxu0 %v668
        %v789 = vpop.f32.mrb[0].mxu0
        %v790 = vadd.f32 0.0, %v789
        %v791 = vpop.f32.mrb[0].mxu0
        %792 = vmatprep.mubr.f32.mxu0 0.0
        %793 = vmatmul.mubr.f32.gmra.mrb[0].mxu0 %v671
        %v794 = vpop.f32.mrb[0].mxu0
        %v795 = vadd.f32 0.0, %v794
        %v796 = vpop.f32.mrb[0].mxu0
        %797 = vmatprep.mubr.f32.mxu0 0.0
        %798 = vmatmul.mubr.f32.gmra.mrb[0].mxu0 %v674
        %v799 = vpop.f32.mrb[0].mxu0
        %v800 = vadd.f32 0.0, %v799
        %v801 = vpop.f32.mrb[0].mxu0
        %802 = vmatprep.mubr.f32.mxu0 0.0
        %803 = vmatmul.mubr.f32.gmra.mrb[0].mxu0 %v677
        %v804 = vpop.f32.mrb[0].mxu0
        %v805 = vadd.f32 0.0, %v804
        %v806 = vpop.f32.mrb[0].mxu0
        %807 = vmatprep.mubr.f32.mxu0 0.0
        %808 = vmatmul.mubr.f32.gmra.mrb[0].mxu0 %v680
        %v809 = vpop.f32.mrb[0].mxu0
        %v810 = vadd.f32 0.0, %v809
        %v811 = vpop.f32.mrb[0].mxu0
        %812 = vmatprep.mubr.f32.mxu0 0.0
        %813 = vmatmul.mubr.f32.gmra.mrb[0].mxu0 %v683
        %v814 = vpop.f32.mrb[0].mxu0
        %v815 = vadd.f32 0.0, %v814
        %v816 = vpop.f32.mrb[0].mxu0
        %817 = vmatprep.mubr.f32.mxu0 0.0
        %818 = vmatmul.mubr.f32.gmra.mrb[0].mxu0 %v686
        %v819 = vpop.f32.mrb[0].mxu0
        %v820 = vadd.f32 0.0, %v819
        %v821 = vpop.f32.mrb[0].mxu0
        %822 = vmatprep.mubr.f32.mxu0 0.0
        %823 = vmatmul.mubr.f32.gmra.mrb[0].mxu0 %v689
        %v824 = vpop.f32.mrb[0].mxu0
        %v825 = vadd.f32 0.0, %v824
        %v826 = vpop.f32.mrb[0].mxu0
        %827 = vmatprep.mubr.f32.mxu0 0.0
        %828 = vmatmul.mubr.f32.gmra.mrb[0].mxu0 %v692
        %v829 = vpop.f32.mrb[0].mxu0
        %v830 = vadd.f32 0.0, %v829
        %v831 = vpop.f32.mrb[0].mxu0
        %832 = vmatprep.mubr.f32.mxu0 0.0
        %833 = vmatmul.mubr.f32.gmra.mrb[0].mxu0 %v695
        %v834 = vpop.f32.mrb[0].mxu0
        %v835 = vadd.f32 0.0, %v834
        %v836 = vpop.f32.mrb[0].mxu0
        %837 = vmatprep.mubr.f32.mxu0 0.0
        %838 = vmatmul.mubr.f32.gmra.mrb[0].mxu0 %v698
        %v839 = vpop.f32.mrb[0].mxu0
        %v840 = vadd.f32 0.0, %v839
        %v841 = vpop.f32.mrb[0].mxu0
        %842 = vmatprep.mubr.f32.mxu0 0.0
        %843 = vmatmul.mubr.f32.gmra.mrb[0].mxu0 %v701
        %v844 = vpop.f32.mrb[0].mxu0
        %v845 = vadd.f32 0.0, %v844
        %v846 = vpop.f32.mrb[0].mxu0
        %847 = vdwg.mxu0
        %848 = vst [vmem:[%s191] sm:$0xff] %v770
        %849 = vst [vmem:[%s191 + $0x8] sm:$0xff] %v775
        %850 = vst [vmem:[%s191 + $0x10] sm:$0xff] %v780
        %851 = vst [vmem:[%s191 + $0x18] sm:$0xff] %v785
        %852 = vst [vmem:[%s191 + $0x20] sm:$0xff] %v790
        %853 = vst [vmem:[%s191 + $0x28] sm:$0xff] %v795
        %854 = vst [vmem:[%s191 + $0x30] sm:$0xff] %v800
        %855 = vst [vmem:[%s191 + $0x38] sm:$0xff] %v805
        %856 = vst [vmem:[%s191 + $0x40] sm:$0xff] %v810
        %857 = vst [vmem:[%s191 + $0x48] sm:$0xff] %v815
        %858 = vst [vmem:[%s191 + $0x50] sm:$0xff] %v820
        %859 = vst [vmem:[%s191 + $0x58] sm:$0xff] %v825
        %860 = vst [vmem:[%s191 + $0x60] sm:$0xff] %v830
        %861 = vst [vmem:[%s191 + $0x68] sm:$0xff] %v835
        %862 = vst [vmem:[%s191 + $0x70] sm:$0xff] %v840
        %863 = vst [vmem:[%s191 + $0x78] sm:$0xff] %v845
        %s864 = sand.u32 %s115, 1
        %s865 = scalar_lea.sflag [#allocation3], %s864
        %s866 = sand.u32 %s115, 1
        %s867 = smul.addr %s866, 128
        %s868 = scalar_lea.vmem [#allocation2], %s867
        // Predicated region
        $region37: #{mlp_decoder_forward.1} parent=35 // pred_check
          %p869 = pneg %p125
        $region38: #{mlp_decoder_forward.1} parent=35 // pred_check_branch
          %871 = sbr.rel (%p869) target = $region40
        $region39: #{mlp_decoder_forward.1} parent=35 // pred_region
          %s872 = smul.u32 16, %s18
          %s874 = ssub.s32 2048, 2048
          %875 = vsyncadd %s865, %s874
          %s876 = smul.addr %s872, 128
          %s877 = scalar_lea.hbm %s4, %s876
          %s878 = sshll.u32 %s868, 4
          %s879 = int_to_ptr.vmem [resolvable:$true] %s878
          %884 = dma.vmem_to_hbm [thread:$0]  %s879, 2048, %s877, %s865, 128, 128, 8
        $region40: #{mlp_decoder_forward.1} parent=35 // pred_fallthru
          _
      $region36: #{mlp_decoder_forward.1} parent=5 // pred_fallthru
        _
      %p885 = scmp.le.s32.totalorder 2, %s13
      // Predicated region
      $region41: #{mlp_decoder_forward.1} parent=5 // pred_check
        %p886 = pneg %p885
      $region42: #{mlp_decoder_forward.1} parent=5 // pred_check_branch
        %888 = sbr.rel (%p886) target = $region44
      $region43: #{mlp_decoder_forward.1} parent=5 // pred_region
        %s889 = ssub.s32 %s13, 2
        // Predicated region
        $region45: #{mlp_decoder_forward.1} parent=43 // pred_check
          %p890 = pneg %p131
        $region46: #{mlp_decoder_forward.1} parent=43 // pred_check_branch
          %892 = sbr.rel (%p890) target = $region48
        $region47: #{mlp_decoder_forward.1} parent=43 // pred_region
          %s893 = sand.u32 %s116, 1
          %s894 = scalar_lea.sflag [#allocation3], %s893
          %s895 = sand.u32 %s116, 1
          %s896 = smul.addr %s895, 128
          %s897 = scalar_lea.vmem [#allocation2], %s896
          %898 = dma.done %s894, 2048
        $region48: #{mlp_decoder_forward.1} parent=43 // pred_fallthru
          _
      $region44: #{mlp_decoder_forward.1} parent=5 // pred_fallthru
        _
    $region6: #{mlp_decoder_forward.1} parent=1 // loop_footer
      %s17 = sadd.s32 1, %s13
    $region7: #{mlp_decoder_forward.1} parent=1 // loop_footer_branch
      %12 = sbr.rel target = $region3
    $region8: #{mlp_decoder_forward.1} parent=1 // loop_exit
      _
    %899 = vsyncpa [#allocation3], 1
    %s900 = scalar_lea.sflag [#allocation3], 1
    %901 = vsyncpa %s900, 1

</llo_original>
